<compile_context>
chip_gen: v5e
topology: v5e:2x2
jax: 0.10.0
libtpu: 0.0.40
codegen_flags: <defaults>
</compile_context>

<pallas_src>
from functools import partial

import jax
import jax.numpy as jnp
from jax.experimental import pallas as pl
from jax.experimental.pallas import tpu as pltpu


# --------------------------------------------------------------------------- #
# Kernels
# --------------------------------------------------------------------------- #
def _upsample_folded_kernel(x_ref, s_ref, o_ref, *, compute_dtype):
    """Grouped rows; the row replication is folded into the 0/1 spread matrix."""
    x = x_ref[...]
    if x.dtype != compute_dtype:
        x = x.astype(compute_dtype)                 # VPU cast, hidden under DMA
    y = jnp.dot(x, s_ref[...], preferred_element_type=jnp.float32)
    o_ref[...] = y.astype(o_ref.dtype)


def _upsample_plain_kernel(x_ref, s_ref, o_ref, *, scale, wo, lane_aligned,
                           compute_dtype):
    """One input row -> one output row; replicate the expanded row `scale` times."""
    x = x_ref[...]
    if x.dtype != compute_dtype:
        x = x.astype(compute_dtype)
    y = jnp.dot(x, s_ref[...], preferred_element_type=jnp.float32)
    y = y.astype(o_ref.dtype)                        # (tr, wo)
    if lane_aligned:
        # wo % 128 == 0: `scale` unmasked slice stores, no concatenated temp.
        for r in range(scale):
            o_ref[:, r * wo:(r + 1) * wo] = y
    else:
        # Single lane-dense store is the better option when wo is unaligned.
        o_ref[...] = jnp.concatenate([y] * scale, axis=1)


def _upsample_chunked_kernel(x_ref, s_ref, o_ref, *, scale, wo, wc,
                             compute_dtype):
    """W chunked along the inner grid axis; the output row block stays resident."""
    j = pl.program_id(1)
    x = x_ref[...]
    if x.dtype != compute_dtype:
        x = x.astype(compute_dtype)
    y = jnp.dot(x, s_ref[...], preferred_element_type=jnp.float32)
    y = y.astype(o_ref.dtype)                        # (tr, scale * wc)
    swc = scale * wc
    for r in range(scale):
        start = pl.multiple_of(r * wo + j * swc, 128)
        o_ref[:, pl.ds(start, swc)] = y


# --------------------------------------------------------------------------- #
# Wrapper helpers
# --------------------------------------------------------------------------- #
def _hw_policy():
    """Per-generation block-size target and VMEM budget."""
    kind = ""
    try:
        kind = jax.devices()[0].device_kind.lower()
    except Exception:
        pass
    if "v7" in kind:        # 64 MiB VMEM, ~3.2 TB/s HBM, 2 TensorCores
        return {"target": 8 << 20, "vmem_cap": 48 << 20, "two_cores": True}
    # v5e / v6e: 128 MiB physical VMEM (scoped default is only 16/32 MiB).
    return {"target": 16 << 20, "vmem_cap": 96 << 20, "two_cores": False}


def _pick_group(m, w, lane):
    """Pick g (g | m, g*w <= 256) so g*lane is a multiple of 128 (lane-dense)."""
    if lane % 128 == 0:
        return 1
    exact, at_least = [], []
    for g in range(2, min(m, 128) + 1):
        if g * w > 256:          # keep the MXU K dimension (nearly) free
            break
        if m % g:
            continue
        if (g * lane) % 128 == 0:
            exact.append(g)
        elif g * lane >= 128:
            at_least.append(g)
    if exact:
        dense_in = [g for g in exact if g * w <= 128]   # also densify input loads
        return max(dense_in) if dense_in else exact[0]
    if at_least:
        return at_least[0]
    return 1


def _row_tile(rows, bytes_per_row, target_bytes, align):
    tr = (target_bytes // max(1, bytes_per_row)) // align * align
    tr = max(align, tr)
    return int(min(tr, rows))


# --------------------------------------------------------------------------- #
# Public entry point
# --------------------------------------------------------------------------- #
def upsampling_layer(x, scale_factor=2):
    """Pallas TPU equivalent of UpsamplingLayer.forward (nearest, integer scale)."""
    if scale_factor <= 1:
        return x
    s = int(scale_factor)
    # F.interpolate 'nearest' with a non-integer scale has different semantics.
    assert s == scale_factor, "kernel supports integer scale_factor only"

    N, C, H, W = x.shape
    Ho, Wo = H * s, W * s
    M = N * C * H
    lane = s * Wo                      # output lane width produced by one input row

    in_dt = x.dtype
    isz = jnp.dtype(in_dt).itemsize
    if jnp.issubdtype(in_dt, jnp.floating) and isz <= 4:
        compute_dtype = in_dt          # 0/1 matmul + f32 accumulation is exact
    else:
        # TODO(synk): integer values >= 2**24 (or f64) lose precision through the
        # f32 MXU path; such inputs would need a pure-copy (non-MXU) kernel.
        compute_dtype = jnp.float32
    c_isz = jnp.dtype(compute_dtype).itemsize

    policy = _hw_policy()
    align = max(8, 32 // max(1, isz))  # sublane packing: 8 f32, 16 bf16, 32 int8
    WC = 256                           # W-chunk width for the large-W path

    g = _pick_group(M, W, lane)

    if g > 1:
        # ---- grouped / folded-replication path (small feature maps) ---------- #
        Mg, gW, gL = M // g, g * W, g * lane
        rows_i = jnp.arange(gW, dtype=jnp.int32)[:, None]
        cols_i = jnp.arange(gL, dtype=jnp.int32)[None, :]
        # Block-diagonal 0/1 spread with the s-fold row replication folded in.
        S = ((rows_i // W == cols_i // lane) &
             (rows_i % W == (cols_i % Wo) // s)).astype(compute_dtype)
        x2 = x.reshape(Mg, gW)
        s_bytes = gW * gL * c_isz
        target = min(policy["target"],
                     max(1 << 20, (policy["vmem_cap"] - 2 * s_bytes - (4 << 20)) // 2))
        tr = _row_tile(Mg, gW * isz + gL * isz, target, align)
        grid = (pl.cdiv(Mg, tr),)
        in_specs = [pl.BlockSpec((tr, gW), lambda i: (i, 0)),
                    # TODO(synk): pipeline_mode=pl.Buffered(1) would halve the
                    # resident-S VMEM once single-buffered inputs are validated.
                    pl.BlockSpec((gW, gL), lambda i: (0, 0))]
        out_specs = pl.BlockSpec((tr, gL), lambda i: (i, 0))
        out_rows, out_cols = Mg, gL
        in_block_b, out_block_b = tr * gW * isz, tr * gL * isz
        kernel = partial(_upsample_folded_kernel, compute_dtype=compute_dtype)
        inner_sem = ()
    elif W % WC == 0 and W // WC >= 2 and Wo % 128 == 0:
        # ---- chunked-W path (large feature maps: keep MXU O(s*W*Wc)) --------- #
        x2 = x.reshape(M, W)
        S = (jnp.arange(s * WC, dtype=jnp.int32)[None, :] // s
             == jnp.arange(WC, dtype=jnp.int32)[:, None]).astype(compute_dtype)
        s_bytes = WC * s * WC * c_isz
        target = min(policy["target"],
                     max(1 << 20, (policy["vmem_cap"] - 2 * s_bytes - (4 << 20)) // 2))
        tr = _row_tile(M, WC * isz + lane * isz, target, align)
        grid = (pl.cdiv(M, tr), W // WC)
        in_specs = [pl.BlockSpec((tr, WC), lambda i, j: (i, j)),
                    pl.BlockSpec((WC, s * WC), lambda i, j: (0, 0))]
        out_specs = pl.BlockSpec((tr, lane), lambda i, j: (i, 0))  # resident over j
        out_rows, out_cols = M, lane
        in_block_b, out_block_b = tr * WC * isz, tr * lane * isz
        kernel = partial(_upsample_chunked_kernel, scale=s, wo=Wo, wc=WC,
                         compute_dtype=compute_dtype)
        inner_sem = ("arbitrary",)
    else:
        # ---- plain path (s*Wo already lane-dense enough) --------------------- #
        x2 = x.reshape(M, W)
        S = (jnp.arange(Wo, dtype=jnp.int32)[None, :] // s
             == jnp.arange(W, dtype=jnp.int32)[:, None]).astype(compute_dtype)
        s_bytes = W * Wo * c_isz
        target = min(policy["target"],
                     max(1 << 20, (policy["vmem_cap"] - 2 * s_bytes - (4 << 20)) // 2))
        tr = _row_tile(M, W * isz + lane * isz, target, align)
        grid = (pl.cdiv(M, tr),)
        in_specs = [pl.BlockSpec((tr, W), lambda i: (i, 0)),
                    pl.BlockSpec((W, Wo), lambda i: (0, 0))]
        out_specs = pl.BlockSpec((tr, lane), lambda i: (i, 0))
        out_rows, out_cols = M, lane
        in_block_b, out_block_b = tr * W * isz, tr * lane * isz
        kernel = partial(_upsample_plain_kernel, scale=s, wo=Wo,
                         lane_aligned=(Wo % 128 == 0), compute_dtype=compute_dtype)
        inner_sem = ()

    # VMEM budget from the actual double-buffered footprint (not hard-coded).
    needed = 2 * (in_block_b + out_block_b) + 2 * s_bytes + (2 << 20)
    vmem_limit = int(min(policy["vmem_cap"], max(needed, 32 << 20)))

    if policy["two_cores"]:
        sem_candidates = [
            (pltpu.CORE_PARALLEL,) + tuple(pltpu.ARBITRARY for _ in inner_sem),
            ("parallel",) + inner_sem,          # fallback if CORE_PARALLEL rejected
        ]
    else:
        sem_candidates = [("parallel",) + inner_sem]

    out2, last_err = None, None
    for dims in sem_candidates:
        try:
            out2 = pl.pallas_call(
                kernel,
                out_shape=jax.ShapeDtypeStruct((out_rows, out_cols), in_dt),
                grid_spec=pltpu.PrefetchScalarGridSpec(
                    num_scalar_prefetch=0,
                    grid=grid,
                    in_specs=in_specs,
                    out_specs=out_specs,
                ),
                compiler_params=pltpu.CompilerParams(
                    dimension_semantics=dims,
                    vmem_limit_bytes=vmem_limit,
                ),
            )(x2, S)
            break
        except Exception as e:                   # pragma: no cover
            last_err = e
    if out2 is None:
        raise last_err

    # The 2-D row view is memory-identical to (N, C, Ho, Wo); reshape is free.
    return out2.reshape(N, C, Ho, Wo)


# --------------------------------------------------------------------------- #
# Self-test
# --------------------------------------------------------------------------- #
if __name__ == "__main__":
    key = jax.random.PRNGKey(0)
    x = jax.random.normal(key, (2, 4, 16, 16), dtype=jnp.float32)

    # scale 2 (grouped lane-dense path)
    y = jax.block_until_ready(upsampling_layer(x, scale_factor=2))
    ref = jnp.repeat(jnp.repeat(x, 2, axis=2), 2, axis=3)
    assert y.shape == (2, 4, 32, 32) and y.dtype == x.dtype
    assert jnp.array_equal(y, ref), "mismatch vs nearest-neighbor reference (s=2)"

    # scale 3 (odd scale, grouped path with g=8)
    y3 = jax.block_until_ready(upsampling_layer(x, scale_factor=3))
    ref3 = jnp.repeat(jnp.repeat(x, 3, axis=2), 3, axis=3)
    assert y3.shape == (2, 4, 48, 48)
    assert jnp.array_equal(y3, ref3), "mismatch (s=3)"

    # bf16 input stays bf16 end-to-end (no f32 round trip)
    xb = x.astype(jnp.bfloat16)
    yb = jax.block_until_ready(upsampling_layer(xb, scale_factor=2))
    assert yb.dtype == jnp.bfloat16
    assert jnp.array_equal(yb, jnp.repeat(jnp.repeat(xb, 2, axis=2), 2, axis=3))

    # wide-W input exercises the chunked spread-matmul path
    xw = jax.random.normal(jax.random.PRNGKey(1), (1, 2, 8, 512), dtype=jnp.float32)
    yw = jax.block_until_ready(upsampling_layer(xw, scale_factor=2))
    assert yw.shape == (1, 2, 16, 1024)
    assert jnp.array_equal(yw, jnp.repeat(jnp.repeat(xw, 2, axis=2), 2, axis=3))

    # scale_factor <= 1: identity (module returns x unchanged)
    y1 = jax.block_until_ready(upsampling_layer(x, scale_factor=1))
    assert jnp.array_equal(y1, x)

    print("KERNEL_OK")
</pallas_src>

<mosaic_0001>
module attributes {stable_mosaic.version = 11 : i64} {
  func.func @_upsample_folded_kernel(%arg0: i32, %arg1: memref<16x128xf32, #tpu.memory_space<vmem>>, %arg2: memref<128x512xf32, #tpu.memory_space<vmem>>, %arg3: memref<16x512xf32, #tpu.memory_space<vmem>>) attributes {dimension_semantics = [#tpu.dimension_semantics<parallel>], iteration_bounds = array<i64: 1>, scalar_prefetch = 0 : i64, scratch_operands = 0 : i64, tpu.core_type = #tpu.core_type<tc>, window_params = [{transform_indices = @transform_0, window_bounds = array<i64: 16, 128>}, {pipeline_mode = #tpu.pipeline_mode<synchronous>, transform_indices = @transform_1, window_bounds = array<i64: 128, 512>}, {transform_indices = @transform_2, window_bounds = array<i64: 16, 512>}]} {
    %c0 = arith.constant 0 : index
    %c0_0 = arith.constant 0 : index
    %0 = vector.load %arg1[%c0, %c0_0] : memref<16x128xf32, #tpu.memory_space<vmem>>, vector<16x128xf32>
    %c0_1 = arith.constant 0 : index
    %c0_2 = arith.constant 0 : index
    %1 = vector.load %arg2[%c0_1, %c0_2] : memref<128x512xf32, #tpu.memory_space<vmem>>, vector<128x512xf32>
    %cst = arith.constant dense<0.000000e+00> : vector<16x512xf32>
    %2 = tpu.matmul %0, %1, %cst {dimension_numbers = #tpu.dot_dimension_numbers<[1], [0], [0], [1], [0, 0, 1, 1], [], []>} : vector<16x128xf32>, vector<128x512xf32>, vector<16x512xf32> -> vector<16x512xf32>
    %c0_3 = arith.constant 0 : index
    %c0_4 = arith.constant 0 : index
    %3 = vector.load %arg3[%c0_3, %c0_4] : memref<16x512xf32, #tpu.memory_space<vmem>>, vector<16x512xf32>
    tpu.vector_store %arg3[%c0_3, %c0_4], %2 {strides = array<i32>} : memref<16x512xf32, #tpu.memory_space<vmem>>, vector<16x512xf32>,
    return
  }
  func.func @transform_0(%arg0: i32) -> (i32, i32) {
    %c0_i32 = arith.constant 0 : i32
    %c0_i32_0 = arith.constant 0 : i32
    return %arg0, %c0_i32 : i32, i32
  }
  func.func @transform_1(%arg0: i32) -> (i32, i32) {
    %c0_i32 = arith.constant 0 : i32
    %c0_i32_0 = arith.constant 0 : i32
    %c0_i32_1 = arith.constant 0 : i32
    return %c0_i32, %c0_i32_0 : i32, i32
  }
  func.func @transform_2(%arg0: i32) -> (i32, i32) {
    %c0_i32 = arith.constant 0 : i32
    %c0_i32_0 = arith.constant 0 : i32
    return %arg0, %c0_i32 : i32, i32
  }
}

</mosaic_0001>

<llo_original>
// kernel: tpu_custom_call.1
$region0: #{tpu_custom_call.1}
  #allocation0 [shape = 'u32[]', space=smem, size = 0x4, offset = 0x4, fixed_abs, tag = 'smem constant byte address 0x4 - core index']
  #allocation1 [shape = 'u32[72,128]{1,0:T(1,128)}', space=vmem, size = 0x9000, scoped, tag = 'internal scratch']
  %s0 = inlined_call_operand.hbm [shape: f32[16,128], index: 0, kind: input, shape index: {}]
  %s1 = inlined_call_operand.hbm [shape: f32[128,512], index: 1, kind: input, shape index: {}]
  %s2 = inlined_call_operand.hbm [shape: f32[16,512], index: 2, kind: output, shape index: {}]
  %s3 = sld [smem:[#allocation0]]
  $region26: #{tpu_custom_call.1} parent=0
    _
  %s5 = ssub.s32 1, %s3
  %s6 = scalar_select 0, %s5, %s3
  $region1: #{tpu_custom_call.1} parent=0
    #allocation2 [shape = 'u8[8192]{0}', space=vmem, size = 0x2000, scoped, tag = 'input window, operand 0, single buffered']
    #allocation3 [shape = 's32[1]{0}', space=sflag, size = 0x4, scoped, tag = 'scoped memory for tpu_custom_call.1']
    #allocation4 [shape = 's32[1]{0}', space=sflag, size = 0x4, scoped, tag = 'scoped memory for tpu_custom_call.1']
    #allocation5 [shape = 'u8[262144]{0}', space=vmem, size = 0x40000, scoped, tag = 'input window, operand 1, single buffered']
    #allocation6 [shape = 's32[1]{0}', space=sflag, size = 0x4, scoped, tag = 'scoped memory for tpu_custom_call.1']
    #allocation7 [shape = 'u8[32768]{0}', space=vmem, size = 0x8000, scoped, tag = 'output window, operand 0, single buffered']
    %7 = vsyncpa [#allocation3], 0
    %8 = vsyncpa [#allocation6], 0
    %9 = vsyncpa [#allocation4], 0
    // Predicated region
    $region2: #{tpu_custom_call.1} parent=1 // pred_check
      _
    $region3: #{tpu_custom_call.1} parent=1 // pred_check_branch
      %11 = sbr.rel (0) target = $region5
    $region4: #{tpu_custom_call.1} parent=1 // pred_region
      %13 = vsyncadd [#allocation3], 0
      %s14 = sshll.u32 %s0, 4
      %s15 = int_to_ptr.hbm [resolvable:$true] %s14
      %s16 = sshll.u32 [#allocation2], 4
      %s17 = int_to_ptr.vmem [resolvable:$true] %s16
      %22 = dma.hbm_to_vmem [thread:$0]  %s15, 256, %s17, [#allocation3], 128, 128, 8
    $region5: #{tpu_custom_call.1} parent=1 // pred_fallthru
      _
    // Predicated region
    $region6: #{tpu_custom_call.1} parent=1 // pred_check
      _
    $region7: #{tpu_custom_call.1} parent=1 // pred_check_branch
      %24 = sbr.rel (0) target = $region9
    $region8: #{tpu_custom_call.1} parent=1 // pred_region
      %26 = vsyncadd [#allocation6], 0
      %s27 = sshll.u32 %s1, 4
      %s28 = int_to_ptr.hbm [resolvable:$true] %s27
      %s29 = sshll.u32 [#allocation5], 4
      %s30 = int_to_ptr.vmem [resolvable:$true] %s29
      %35 = dma.hbm_to_vmem [thread:$0]  %s28, 8192, %s30, [#allocation6], 512, 512, 32
    $region9: #{tpu_custom_call.1} parent=1 // pred_fallthru
      _
    // Predicated region
    $region10: #{tpu_custom_call.1} parent=1 // pred_check
      _
    $region11: #{tpu_custom_call.1} parent=1 // pred_check_branch
      %37 = sbr.rel (0) target = $region13
    $region12: #{tpu_custom_call.1} parent=1 // pred_region
      %39 = dma.done [#allocation3], 256
    $region13: #{tpu_custom_call.1} parent=1 // pred_fallthru
      _
    // Predicated region
    $region14: #{tpu_custom_call.1} parent=1 // pred_check
      _
    $region15: #{tpu_custom_call.1} parent=1 // pred_check_branch
      %41 = sbr.rel (0) target = $region17
    $region16: #{tpu_custom_call.1} parent=1 // pred_region
      %43 = dma.done [#allocation6], 8192
    $region17: #{tpu_custom_call.1} parent=1 // pred_fallthru
      _
    %v44 = vld [vmem:[#allocation2] sm:$0xff]
    %v45 = vld [vmem:[#allocation2 + $0x8] sm:$0xff]
    %v46 = vld [vmem:[#allocation5] sm:$0xff]
    %v47 = vld [vmem:[#allocation5 + $0x8] sm:$0xff]
    %v48 = vld [vmem:[#allocation5 + $0x10] sm:$0xff]
    %v49 = vld [vmem:[#allocation5 + $0x18] sm:$0xff]
    %v50 = vld [vmem:[#allocation5 + $0x20] sm:$0xff]
    %v51 = vld [vmem:[#allocation5 + $0x28] sm:$0xff]
    %v52 = vld [vmem:[#allocation5 + $0x30] sm:$0xff]
    %v53 = vld [vmem:[#allocation5 + $0x38] sm:$0xff]
    %v54 = vld [vmem:[#allocation5 + $0x40] sm:$0xff]
    %v55 = vld [vmem:[#allocation5 + $0x48] sm:$0xff]
    %v56 = vld [vmem:[#allocation5 + $0x50] sm:$0xff]
    %v57 = vld [vmem:[#allocation5 + $0x58] sm:$0xff]
    %v58 = vld [vmem:[#allocation5 + $0x60] sm:$0xff]
    %v59 = vld [vmem:[#allocation5 + $0x68] sm:$0xff]
    %v60 = vld [vmem:[#allocation5 + $0x70] sm:$0xff]
    %v61 = vld [vmem:[#allocation5 + $0x78] sm:$0xff]
    %v62 = vld [vmem:[#allocation5 + $0x80] sm:$0xff]
    %v63 = vld [vmem:[#allocation5 + $0x88] sm:$0xff]
    %v64 = vld [vmem:[#allocation5 + $0x90] sm:$0xff]
    %v65 = vld [vmem:[#allocation5 + $0x98] sm:$0xff]
    %v66 = vld [vmem:[#allocation5 + $0xa0] sm:$0xff]
    %v67 = vld [vmem:[#allocation5 + $0xa8] sm:$0xff]
    %v68 = vld [vmem:[#allocation5 + $0xb0] sm:$0xff]
    %v69 = vld [vmem:[#allocation5 + $0xb8] sm:$0xff]
    %v70 = vld [vmem:[#allocation5 + $0xc0] sm:$0xff]
    %v71 = vld [vmem:[#allocation5 + $0xc8] sm:$0xff]
    %v72 = vld [vmem:[#allocation5 + $0xd0] sm:$0xff]
    %v73 = vld [vmem:[#allocation5 + $0xd8] sm:$0xff]
    %v74 = vld [vmem:[#allocation5 + $0xe0] sm:$0xff]
    %v75 = vld [vmem:[#allocation5 + $0xe8] sm:$0xff]
    %v76 = vld [vmem:[#allocation5 + $0xf0] sm:$0xff]
    %v77 = vld [vmem:[#allocation5 + $0xf8] sm:$0xff]
    %v78 = vld [vmem:[#allocation5 + $0x100] sm:$0xff]
    %v79 = vld [vmem:[#allocation5 + $0x108] sm:$0xff]
    %v80 = vld [vmem:[#allocation5 + $0x110] sm:$0xff]
    %v81 = vld [vmem:[#allocation5 + $0x118] sm:$0xff]
    %v82 = vld [vmem:[#allocation5 + $0x120] sm:$0xff]
    %v83 = vld [vmem:[#allocation5 + $0x128] sm:$0xff]
    %v84 = vld [vmem:[#allocation5 + $0x130] sm:$0xff]
    %v85 = vld [vmem:[#allocation5 + $0x138] sm:$0xff]
    %v86 = vld [vmem:[#allocation5 + $0x140] sm:$0xff]
    %v87 = vld [vmem:[#allocation5 + $0x148] sm:$0xff]
    %v88 = vld [vmem:[#allocation5 + $0x150] sm:$0xff]
    %v89 = vld [vmem:[#allocation5 + $0x158] sm:$0xff]
    %v90 = vld [vmem:[#allocation5 + $0x160] sm:$0xff]
    %v91 = vld [vmem:[#allocation5 + $0x168] sm:$0xff]
    %v92 = vld [vmem:[#allocation5 + $0x170] sm:$0xff]
    %v93 = vld [vmem:[#allocation5 + $0x178] sm:$0xff]
    %v94 = vld [vmem:[#allocation5 + $0x180] sm:$0xff]
    %v95 = vld [vmem:[#allocation5 + $0x188] sm:$0xff]
    %v96 = vld [vmem:[#allocation5 + $0x190] sm:$0xff]
    %v97 = vld [vmem:[#allocation5 + $0x198] sm:$0xff]
    %v98 = vld [vmem:[#allocation5 + $0x1a0] sm:$0xff]
    %v99 = vld [vmem:[#allocation5 + $0x1a8] sm:$0xff]
    %v100 = vld [vmem:[#allocation5 + $0x1b0] sm:$0xff]
    %v101 = vld [vmem:[#allocation5 + $0x1b8] sm:$0xff]
    %v102 = vld [vmem:[#allocation5 + $0x1c0] sm:$0xff]
    %v103 = vld [vmem:[#allocation5 + $0x1c8] sm:$0xff]
    %v104 = vld [vmem:[#allocation5 + $0x1d0] sm:$0xff]
    %v105 = vld [vmem:[#allocation5 + $0x1d8] sm:$0xff]
    %v106 = vld [vmem:[#allocation5 + $0x1e0] sm:$0xff]
    %v107 = vld [vmem:[#allocation5 + $0x1e8] sm:$0xff]
    %v108 = vld [vmem:[#allocation5 + $0x1f0] sm:$0xff]
    %v109 = vld [vmem:[#allocation5 + $0x1f8] sm:$0xff]
    %110 = vmatpush.msra.mxu0 %v106
    %111 = vmatpush.msra.mxu0 %v102
    %112 = vmatpush.msra.mxu0 %v98
    %113 = vmatpush.msra.mxu0 %v94
    %114 = vmatpush.msra.mxu0 %v90
    %115 = vmatpush.msra.mxu0 %v86
    %116 = vmatpush.msra.mxu0 %v82
    %117 = vmatpush.msra.mxu0 %v78
    %118 = vmatpush.msra.mxu0 %v74
    %119 = vmatpush.msra.mxu0 %v70
    %120 = vmatpush.msra.mxu0 %v66
    %121 = vmatpush.msra.mxu0 %v62
    %122 = vmatpush.msra.mxu0 %v58
    %123 = vmatpush.msra.mxu0 %v54
    %124 = vmatpush.msra.mxu0 %v50
    %125 = vmatpush.msra.mxu0 %v46
    %126 = vmatmul.f32.gmra.mxu0 %v44
    %v127 = vpop.f32.mrf.mxu0
    %v128 = vadd.f32 0.0, %v127
    %129 = vmatmul.f32.gmra.mxu0 %v45
    %v130 = vpop.f32.mrf.mxu0
    %v131 = vadd.f32 0.0, %v130
    %132 = vdwg.mxu0
    %133 = vmatpush.msra.mxu0 %v107
    %134 = vmatpush.msra.mxu0 %v103
    %135 = vmatpush.msra.mxu0 %v99
    %136 = vmatpush.msra.mxu0 %v95
    %137 = vmatpush.msra.mxu0 %v91
    %138 = vmatpush.msra.mxu0 %v87
    %139 = vmatpush.msra.mxu0 %v83
    %140 = vmatpush.msra.mxu0 %v79
    %141 = vmatpush.msra.mxu0 %v75
    %142 = vmatpush.msra.mxu0 %v71
    %143 = vmatpush.msra.mxu0 %v67
    %144 = vmatpush.msra.mxu0 %v63
    %145 = vmatpush.msra.mxu0 %v59
    %146 = vmatpush.msra.mxu0 %v55
    %147 = vmatpush.msra.mxu0 %v51
    %148 = vmatpush.msra.mxu0 %v47
    %149 = vmatmul.f32.gmra.mxu0 %v44
    %v150 = vpop.f32.mrf.mxu0
    %v151 = vadd.f32 0.0, %v150
    %152 = vmatmul.f32.gmra.mxu0 %v45
    %v153 = vpop.f32.mrf.mxu0
    %v154 = vadd.f32 0.0, %v153
    %155 = vdwg.mxu0
    %156 = vmatpush.msra.mxu0 %v108
    %157 = vmatpush.msra.mxu0 %v104
    %158 = vmatpush.msra.mxu0 %v100
    %159 = vmatpush.msra.mxu0 %v96
    %160 = vmatpush.msra.mxu0 %v92
    %161 = vmatpush.msra.mxu0 %v88
    %162 = vmatpush.msra.mxu0 %v84
    %163 = vmatpush.msra.mxu0 %v80
    %164 = vmatpush.msra.mxu0 %v76
    %165 = vmatpush.msra.mxu0 %v72
    %166 = vmatpush.msra.mxu0 %v68
    %167 = vmatpush.msra.mxu0 %v64
    %168 = vmatpush.msra.mxu0 %v60
    %169 = vmatpush.msra.mxu0 %v56
    %170 = vmatpush.msra.mxu0 %v52
    %171 = vmatpush.msra.mxu0 %v48
    %172 = vmatmul.f32.gmra.mxu0 %v44
    %v173 = vpop.f32.mrf.mxu0
    %v174 = vadd.f32 0.0, %v173
    %175 = vmatmul.f32.gmra.mxu0 %v45
    %v176 = vpop.f32.mrf.mxu0
    %v177 = vadd.f32 0.0, %v176
    %178 = vdwg.mxu0
    %179 = vmatpush.msra.mxu0 %v109
    %180 = vmatpush.msra.mxu0 %v105
    %181 = vmatpush.msra.mxu0 %v101
    %182 = vmatpush.msra.mxu0 %v97
    %183 = vmatpush.msra.mxu0 %v93
    %184 = vmatpush.msra.mxu0 %v89
    %185 = vmatpush.msra.mxu0 %v85
    %186 = vmatpush.msra.mxu0 %v81
    %187 = vmatpush.msra.mxu0 %v77
    %188 = vmatpush.msra.mxu0 %v73
    %189 = vmatpush.msra.mxu0 %v69
    %190 = vmatpush.msra.mxu0 %v65
    %191 = vmatpush.msra.mxu0 %v61
    %192 = vmatpush.msra.mxu0 %v57
    %193 = vmatpush.msra.mxu0 %v53
    %194 = vmatpush.msra.mxu0 %v49
    %195 = vmatmul.f32.gmra.mxu0 %v44
    %v196 = vpop.f32.mrf.mxu0
    %v197 = vadd.f32 0.0, %v196
    %198 = vmatmul.f32.gmra.mxu0 %v45
    %v199 = vpop.f32.mrf.mxu0
    %v200 = vadd.f32 0.0, %v199
    %201 = vdwg.mxu0
    %202 = vst [vmem:[#allocation7] sm:$0xff] %v128
    %203 = vst [vmem:[#allocation7 + $0x8] sm:$0xff] %v151
    %204 = vst [vmem:[#allocation7 + $0x10] sm:$0xff] %v174
    %205 = vst [vmem:[#allocation7 + $0x18] sm:$0xff] %v197
    %206 = vst [vmem:[#allocation7 + $0x20] sm:$0xff] %v131
    %207 = vst [vmem:[#allocation7 + $0x28] sm:$0xff] %v154
    %208 = vst [vmem:[#allocation7 + $0x30] sm:$0xff] %v177
    %209 = vst [vmem:[#allocation7 + $0x38] sm:$0xff] %v200
    // Predicated region
    $region18: #{tpu_custom_call.1} parent=1 // pred_check
      _
    $region19: #{tpu_custom_call.1} parent=1 // pred_check_branch
      %211 = sbr.rel (0) target = $region21
    $region20: #{tpu_custom_call.1} parent=1 // pred_region
      %213 = vsyncadd [#allocation4], 0
      %s214 = sshll.u32 [#allocation7], 4
      %s215 = int_to_ptr.vmem [resolvable:$true] %s214
      %s216 = sshll.u32 %s2, 4
      %s217 = int_to_ptr.hbm [resolvable:$true] %s216
      %222 = dma.vmem_to_hbm [thread:$0]  %s215, 1024, %s217, [#allocation4], 512, 512, 32
    $region21: #{tpu_custom_call.1} parent=1 // pred_fallthru
      _
    // Predicated region
    $region22: #{tpu_custom_call.1} parent=1 // pred_check
      _
    $region23: #{tpu_custom_call.1} parent=1 // pred_check_branch
      %224 = sbr.rel (0) target = $region25
    $region24: #{tpu_custom_call.1} parent=1 // pred_region
      %226 = dma.done [#allocation4], 1024
    $region25: #{tpu_custom_call.1} parent=1 // pred_fallthru
      _
    %227 = vsyncpa [#allocation3], 1
    %228 = vsyncpa [#allocation6], 1
    %229 = vsyncpa [#allocation4], 1

</llo_original>
